<compile_context>
chip_gen: v6e
topology: v6e:2x2x1
jax: 0.10.0
libtpu: 0.0.40
codegen_flags: <defaults>
</compile_context>

<pallas_src>
import jax
import jax.numpy as jnp
from jax.experimental import pallas as pl
from jax.experimental.pallas import tpu as pltpu

LANE = 128
ROW_ALIGN = 16  # multiple of 16 keeps bf16 (16,128) sublane packing clean for all tiles


def _round_up(x, m):
    return (x + m - 1) // m * m


def _cdiv(a, b):
    return -(-a // b)


def _chip_config():
    """(num_tensorcores_per_device, vmem_limit_bytes, default logits dtype)."""
    kind = ""
    try:
        kind = jax.devices()[0].device_kind.lower()
    except Exception:
        pass
    is_v7 = "v7" in kind
    is_v5e = ("v5e" in kind) or ("v5 lite" in kind) or ("v5litepod" in kind)
    n_tc = 2 if is_v7 else 1
    vmem_limit = (48 if is_v7 else 64) * 1024 * 1024
    logits_dtype = jnp.float32 if is_v5e else jnp.bfloat16
    return n_tc, vmem_limit, logits_dtype


def _pick_tm(m, n_tc):
    """Padding-aware, megacore-aware row tile (multiple of ROW_ALIGN)."""
    m_al = _round_up(max(m, 1), ROW_ALIGN)
    cap = 1024 if n_tc >= 2 else 2048          # v7x: 64 MiB VMEM/TC; v5e/v6e: 128 MiB
    ntiles = _cdiv(m_al, cap)
    if n_tc >= 2 and m_al >= n_tc * ROW_ALIGN:
        ntiles = max(ntiles, n_tc)             # give every TensorCore at least one i-tile
    return _round_up(_cdiv(m_al, ntiles), ROW_ALIGN)


# --------------------------------------------------------------------------------------
# Kernels
# --------------------------------------------------------------------------------------
def _vlm_train_kernel(x_ref, eps_ref,
                      wml_ref, bml_ref,
                      wo_ref, bo_ref,
                      headT_ref,
                      out_ref, mean_ref, logstd_ref, std_ref,
                      o_scratch):
    j = pl.program_id(1)          # n_cls tile index (innermost, sequential, "arbitrary")
    npad = mean_ref.shape[1]      # padded latent width (multiple of 128)

    # Heavy per-row work only once per M tile (first n_cls tile).
    @pl.when(j == 0)
    def _():
        xb = x_ref[...].astype(jnp.bfloat16)                               # cast once
        # Fused mean / log_std projection: bf16 MXU inputs, f32 accumulation.
        y = jnp.dot(xb, wml_ref[...], preferred_element_type=jnp.float32) + bml_ref[...]
        mean = y[:, :npad]
        mean_ref[...] = mean                                               # store early
        log_std = jnp.clip(y[:, npad:], -2.0, 10.0)
        logstd_ref[...] = log_std
        std = jnp.exp(log_std)
        std_ref[...] = std
        z = mean + eps_ref[...] * std                                      # (TM, NP) f32
        o = jnp.dot(z.astype(jnp.bfloat16), wo_ref[...],
                    preferred_element_type=jnp.float32) + bo_ref[...]      # (TM, H) f32
        o_scratch[...] = o.astype(jnp.bfloat16)

    # LM head, streamed over n_cls tiles (lane-dense TN-wide stores).
    out_ref[...] = jnp.dot(o_scratch[...], headT_ref[...],
                           preferred_element_type=jnp.float32).astype(out_ref.dtype)


def _vlm_eval_kernel(x_ref,
                     wm_ref, bm_ref,
                     wo_ref, bo_ref,
                     headT_ref,
                     out_ref, mean_ref,
                     o_scratch):
    j = pl.program_id(1)

    @pl.when(j == 0)
    def _():
        xb = x_ref[...].astype(jnp.bfloat16)
        mean = jnp.dot(xb, wm_ref[...], preferred_element_type=jnp.float32) + bm_ref[...]
        mean_ref[...] = mean
        o = jnp.dot(mean.astype(jnp.bfloat16), wo_ref[...],
                    preferred_element_type=jnp.float32) + bo_ref[...]
        o_scratch[...] = o.astype(jnp.bfloat16)

    out_ref[...] = jnp.dot(o_scratch[...], headT_ref[...],
                           preferred_element_type=jnp.float32).astype(out_ref.dtype)


# --------------------------------------------------------------------------------------
# Parameter preparation (padding / fusing / bf16 casting)
# --------------------------------------------------------------------------------------
def init_params(key, H, n, n_cls):
    """Deterministic synthetic raw parameters (pre-transposed layout: (in, out))."""
    ks = jax.random.split(key, 7)
    scale = 0.05
    return {
        "wm":  scale * jax.random.normal(ks[0], (H, n), jnp.float32),      # Linear(H, n)
        "bm":  scale * jax.random.normal(ks[1], (1, n), jnp.float32),
        "wls": scale * jax.random.normal(ks[2], (H, n), jnp.float32),      # Linear(H, n)
        "bls": scale * jax.random.normal(ks[3], (1, n), jnp.float32),
        "wo":  scale * jax.random.normal(ks[4], (n, H), jnp.float32),      # Linear(n, H)
        "bo":  scale * jax.random.normal(ks[5], (1, H), jnp.float32),
        "headT": (scale * jax.random.normal(ks[6], (n_cls, H), jnp.float32)).T,  # (H, n_cls)
    }


def prepare_params(raw, n, n_cls):
    """Fuse mean/log_std weights, zero-pad lane dims, cast MXU weights to bf16."""
    H = raw["wm"].shape[0]
    NP = _round_up(n, LANE)
    # Large heads padded to a multiple of 512 so TN=512 always divides cleanly.
    NCP = _round_up(n_cls, LANE)
    if NCP > 512:
        NCP = _round_up(n_cls, 512)

    # Fused [mean | log_std] projection, zero-padded so padded lanes are exactly 0.
    wml = jnp.zeros((H, 2 * NP), jnp.float32)
    wml = wml.at[:, :n].set(raw["wm"]).at[:, NP:NP + n].set(raw["wls"])
    bml = jnp.zeros((1, 2 * NP), jnp.float32)
    bml = bml.at[:, :n].set(raw["bm"]).at[:, NP:NP + n].set(raw["bls"])

    # Eval-only mean projection (avoids DMAing the fused weight in eval mode).
    wm_only = jnp.zeros((H, NP), jnp.float32).at[:, :n].set(raw["wm"])
    bm_only = jnp.zeros((1, NP), jnp.float32).at[:, :n].set(raw["bm"])

    # Output projection: padded latent rows are zero => padded z lanes contribute 0.
    wo = jnp.zeros((NP, H), jnp.float32).at[:n, :].set(raw["wo"]).astype(jnp.bfloat16)
    bo = raw["bo"].astype(jnp.float32)

    # LM head, padded along n_cls (padding sliced off in the wrapper).
    headT = (jnp.zeros((H, NCP), jnp.float32)
             .at[:, :n_cls].set(raw["headT"]).astype(jnp.bfloat16))

    return {"wml": wml.astype(jnp.bfloat16), "bml": bml,
            "wm": wm_only.astype(jnp.bfloat16), "bm": bm_only,
            "wo": wo, "bo": bo, "headT": headT,
            "n": n, "n_cls": n_cls, "H": H, "NP": NP, "NCP": NCP}


# --------------------------------------------------------------------------------------
# Wrapper
# --------------------------------------------------------------------------------------
def variational_lm_forward(kp, x, eps=None, mode="train", logits_dtype=None):
    """kp: dict from prepare_params. x: (M, H) float32. eps: (M, n) float32 (train)."""
    M, H = x.shape
    n, n_cls = kp["n"], kp["n_cls"]
    NP, NCP = kp["NP"], kp["NCP"]

    n_tc, vmem_limit, auto_logits_dtype = _chip_config()
    if logits_dtype is None:
        logits_dtype = auto_logits_dtype      # bf16 on v6e/v7x (halves logit HBM write)

    TM = _pick_tm(M, n_tc)
    TN = min(NCP, 512)                        # NCP is a multiple of TN by construction
    Mp = _round_up(M, TM)
    grid = (Mp // TM, NCP // TN)

    x_p = jnp.pad(x, ((0, Mp - M), (0, 0))) if Mp != M else x

    x_spec = pl.BlockSpec((TM, H), lambda i, j: (i, 0))
    lat_spec = pl.BlockSpec((TM, NP), lambda i, j: (i, 0))    # eps / mean / log_std / std
    out_spec = pl.BlockSpec((TM, TN), lambda i, j: (i, j))    # logits tile (lane-dense)
    head_spec = pl.BlockSpec((H, TN), lambda i, j: (0, j))    # streamed LM-head tile
    wo_spec = pl.BlockSpec((NP, H), lambda i, j: (0, 0))      # resident
    bo_spec = pl.BlockSpec((1, H), lambda i, j: (0, 0))       # resident

    cparams = pltpu.CompilerParams(
        # i-tiles shard across v7x's 2 TensorCores; j must stay sequential ("arbitrary")
        # because o_scratch and the latent output blocks carry across it.
        dimension_semantics=("parallel", "arbitrary"),
        vmem_limit_bytes=vmem_limit,
    )

    if mode == "train":
        assert eps is not None and eps.shape == (M, n)
        eps_p = jnp.pad(eps, ((0, Mp - M), (0, NP - n)))   # zero-pad => padded z lanes = 0
        fn = pl.pallas_call(
            _vlm_train_kernel,
            out_shape=(
                jax.ShapeDtypeStruct((Mp, NCP), logits_dtype),   # logits
                jax.ShapeDtypeStruct((Mp, NP), jnp.float32),     # mean
                jax.ShapeDtypeStruct((Mp, NP), jnp.float32),     # log_std
                jax.ShapeDtypeStruct((Mp, NP), jnp.float32),     # std
            ),
            grid_spec=pltpu.PrefetchScalarGridSpec(
                num_scalar_prefetch=0,
                grid=grid,
                in_specs=[x_spec, lat_spec,
                          pl.BlockSpec((H, 2 * NP), lambda i, j: (0, 0)),   # fused weight
                          pl.BlockSpec((1, 2 * NP), lambda i, j: (0, 0)),   # fused bias
                          wo_spec, bo_spec, head_spec],
                out_specs=(out_spec, lat_spec, lat_spec, lat_spec),
                scratch_shapes=[pltpu.VMEM((TM, H), jnp.bfloat16)],
            ),
            compiler_params=cparams,
        )
        out, mean, log_std, std = fn(x_p, eps_p,
                                     kp["wml"], kp["bml"],
                                     kp["wo"], kp["bo"],
                                     kp["headT"])
        return (out[:M, :n_cls], mean[:M, :n], log_std[:M, :n], std[:M, :n])
    else:
        fn = pl.pallas_call(
            _vlm_eval_kernel,
            out_shape=(
                jax.ShapeDtypeStruct((Mp, NCP), logits_dtype),
                jax.ShapeDtypeStruct((Mp, NP), jnp.float32),
            ),
            grid_spec=pltpu.PrefetchScalarGridSpec(
                num_scalar_prefetch=0,
                grid=grid,
                in_specs=[x_spec,
                          pl.BlockSpec((H, NP), lambda i, j: (0, 0)),        # mean weight
                          pl.BlockSpec((1, NP), lambda i, j: (0, 0)),        # mean bias
                          wo_spec, bo_spec, head_spec],
                out_specs=(out_spec, lat_spec),
                scratch_shapes=[pltpu.VMEM((TM, H), jnp.bfloat16)],
            ),
            compiler_params=cparams,
        )
        out, mean = fn(x_p, kp["wm"], kp["bm"], kp["wo"], kp["bo"], kp["headT"])
        return out[:M, :n_cls], mean[:M, :n], None, None


# --------------------------------------------------------------------------------------
# Pure-JAX f32 reference (PyTorch semantics)
# --------------------------------------------------------------------------------------
def reference_forward(raw, x, eps=None, mode="train"):
    hp = jax.lax.Precision.HIGHEST
    mean = jnp.dot(x, raw["wm"], precision=hp) + raw["bm"]
    if mode == "train":
        log_std = jnp.clip(jnp.dot(x, raw["wls"], precision=hp) + raw["bls"], -2.0, 10.0)
        std = jnp.exp(log_std)
        z = mean + eps * std
    else:
        log_std, std = None, None
        z = mean
    o = jnp.dot(z, raw["wo"], precision=hp) + raw["bo"]
    out = jnp.dot(o, raw["headT"], precision=hp)
    return out, mean, log_std, std


if __name__ == "__main__":
    # Small shapes consistent with the module: M tokens, hidden H, latent n, n_cls classes.
    M, H, n, n_cls = 8, 32, 16, 8

    key = jax.random.PRNGKey(0)
    k_param, k_x, k_eps = jax.random.split(key, 3)
    raw = init_params(k_param, H, n, n_cls)
    kparams = prepare_params(raw, n, n_cls)

    x = jax.random.normal(k_x, (M, H), jnp.float32)
    eps = jax.random.normal(k_eps, (M, n), jnp.float32)   # torch.randn_like(mean)

    # --- train mode ---
    out, mean, log_std, std = variational_lm_forward(kparams, x, eps, mode="train")
    jax.block_until_ready((out, mean, log_std, std))

    r_out, r_mean, r_ls, r_std = reference_forward(raw, x, eps, mode="train")
    # mean/log_std/std: bf16 MXU inputs, f32 accumulation.
    assert jnp.allclose(mean, r_mean, atol=2e-2, rtol=2e-2)
    assert jnp.allclose(log_std, r_ls, atol=2e-2, rtol=2e-2)
    assert jnp.allclose(std, r_std, atol=2e-2, rtol=2e-2)
    # logits: bf16 matmul chain (+ possibly bf16 storage on v6e/v7x) -> looser tolerance.
    assert jnp.allclose(out.astype(jnp.float32), r_out, atol=5e-2, rtol=5e-2)

    # --- eval mode ---
    out_e, mean_e, ls_e, std_e = variational_lm_forward(kparams, x, mode="eval")
    jax.block_until_ready((out_e, mean_e))
    r_out_e, r_mean_e, _, _ = reference_forward(raw, x, mode="eval")
    assert ls_e is None and std_e is None
    assert jnp.allclose(mean_e, r_mean_e, atol=2e-2, rtol=2e-2)
    assert jnp.allclose(out_e.astype(jnp.float32), r_out_e, atol=5e-2, rtol=5e-2)

    print("KERNEL_OK")
</pallas_src>

<mosaic_0001>
module attributes {stable_mosaic.version = 11 : i64} {
  func.func @_vlm_train_kernel(%arg0: i32, %arg1: i32, %arg2: memref<16x32xf32, #tpu.memory_space<vmem>>, %arg3: memref<16x128xf32, #tpu.memory_space<vmem>>, %arg4: memref<32x256xbf16, #tpu.memory_space<vmem>>, %arg5: memref<1x256xf32, #tpu.memory_space<vmem>>, %arg6: memref<128x32xbf16, #tpu.memory_space<vmem>>, %arg7: memref<1x32xf32, #tpu.memory_space<vmem>>, %arg8: memref<32x128xbf16, #tpu.memory_space<vmem>>, %arg9: memref<16x128xbf16, #tpu.memory_space<vmem>>, %arg10: memref<16x128xf32, #tpu.memory_space<vmem>>, %arg11: memref<16x128xf32, #tpu.memory_space<vmem>>, %arg12: memref<16x128xf32, #tpu.memory_space<vmem>>, %arg13: memref<16x32xbf16, #tpu.memory_space<vmem>>) attributes {dimension_semantics = [#tpu.dimension_semantics<parallel>, #tpu.dimension_semantics<arbitrary>], iteration_bounds = array<i64: 1, 1>, scalar_prefetch = 0 : i64, scratch_operands = 1 : i64, tpu.core_type = #tpu.core_type<tc>, window_params = [{transform_indices = @transform_0, window_bounds = array<i64: 16, 32>}, {transform_indices = @transform_1, window_bounds = array<i64: 16, 128>}, {pipeline_mode = #tpu.pipeline_mode<synchronous>, transform_indices = @transform_2, window_bounds = array<i64: 32, 256>}, {pipeline_mode = #tpu.pipeline_mode<synchronous>, transform_indices = @transform_3, window_bounds = array<i64: 1, 256>}, {pipeline_mode = #tpu.pipeline_mode<synchronous>, transform_indices = @transform_4, window_bounds = array<i64: 128, 32>}, {pipeline_mode = #tpu.pipeline_mode<synchronous>, transform_indices = @transform_5, window_bounds = array<i64: 1, 32>}, {transform_indices = @transform_6, window_bounds = array<i64: 32, 128>}, {transform_indices = @transform_7, window_bounds = array<i64: 16, 128>}, {transform_indices = @transform_8, window_bounds = array<i64: 16, 128>}, {transform_indices = @transform_9, window_bounds = array<i64: 16, 128>}, {transform_indices = @transform_10, window_bounds = array<i64: 16, 128>}]} {
    %c0_i32 = arith.constant 0 : i32
    %0 = arith.cmpi eq, %arg1, %c0_i32 : i32
    %1 = arith.extui %0 : i1 to i32
    %c0_i32_0 = arith.constant 0 : i32
    %2 = arith.cmpi ne, %1, %c0_i32_0 : i32
    scf.if %2 {
      %c0_6 = arith.constant 0 : index
      %c0_7 = arith.constant 0 : index
      %8 = vector.load %arg2[%c0_6, %c0_7] : memref<16x32xf32, #tpu.memory_space<vmem>>, vector<16x32xf32>
      %9 = arith.truncf %8 : vector<16x32xf32> to vector<16x32xbf16>
      %c0_8 = arith.constant 0 : index
      %c0_9 = arith.constant 0 : index
      %10 = vector.load %arg4[%c0_8, %c0_9] : memref<32x256xbf16, #tpu.memory_space<vmem>>, vector<32x256xbf16>
      %cst_10 = arith.constant dense<0.000000e+00> : vector<16x256xf32>
      %11 = tpu.matmul %9, %10, %cst_10 {dimension_numbers = #tpu.dot_dimension_numbers<[1], [0], [0], [1], [0, 0, 1, 1], [], []>} : vector<16x32xbf16>, vector<32x256xbf16>, vector<16x256xf32> -> vector<16x256xf32>
      %c0_11 = arith.constant 0 : index
      %c0_12 = arith.constant 0 : index
      %12 = vector.load %arg5[%c0_11, %c0_12] : memref<1x256xf32, #tpu.memory_space<vmem>>, vector<1x256xf32>
      %13 = vector.broadcast %12 : vector<1x256xf32> to vector<16x256xf32>
      %14 = arith.addf %11, %13 : vector<16x256xf32>
      %15 = vector.extract_strided_slice %14 {offsets = [0, 0], sizes = [16, 128], strides = [1, 1]} : vector<16x256xf32> to vector<16x128xf32>
      %c0_13 = arith.constant 0 : index
      %c0_14 = arith.constant 0 : index
      %16 = vector.load %arg10[%c0_13, %c0_14] : memref<16x128xf32, #tpu.memory_space<vmem>>, vector<16x128xf32>
      tpu.vector_store %arg10[%c0_13, %c0_14], %15 {strides = array<i32>} : memref<16x128xf32, #tpu.memory_space<vmem>>, vector<16x128xf32>,
      %17 = vector.extract_strided_slice %14 {offsets = [0, 128], sizes = [16, 128], strides = [1, 1]} : vector<16x256xf32> to vector<16x128xf32>
      %cst_15 = arith.constant -2.000000e+00 : f32
      %cst_16 = arith.constant 1.000000e+01 : f32
      %18 = vector.broadcast %cst_15 : f32 to vector<16x128xf32>
      %19 = arith.maximumf %18, %17 : vector<16x128xf32>
      %20 = vector.broadcast %cst_16 : f32 to vector<16x128xf32>
      %21 = arith.minimumf %20, %19 : vector<16x128xf32>
      %c0_17 = arith.constant 0 : index
      %c0_18 = arith.constant 0 : index
      %22 = vector.load %arg11[%c0_17, %c0_18] : memref<16x128xf32, #tpu.memory_space<vmem>>, vector<16x128xf32>
      tpu.vector_store %arg11[%c0_17, %c0_18], %21 {strides = array<i32>} : memref<16x128xf32, #tpu.memory_space<vmem>>, vector<16x128xf32>,
      %23 = math.exp %21 : vector<16x128xf32>
      %c0_19 = arith.constant 0 : index
      %c0_20 = arith.constant 0 : index
      %24 = vector.load %arg12[%c0_19, %c0_20] : memref<16x128xf32, #tpu.memory_space<vmem>>, vector<16x128xf32>
      tpu.vector_store %arg12[%c0_19, %c0_20], %23 {strides = array<i32>} : memref<16x128xf32, #tpu.memory_space<vmem>>, vector<16x128xf32>,
      %c0_21 = arith.constant 0 : index
      %c0_22 = arith.constant 0 : index
      %25 = vector.load %arg3[%c0_21, %c0_22] : memref<16x128xf32, #tpu.memory_space<vmem>>, vector<16x128xf32>
      %26 = arith.mulf %25, %23 : vector<16x128xf32>
      %27 = arith.addf %15, %26 : vector<16x128xf32>
      %28 = arith.truncf %27 : vector<16x128xf32> to vector<16x128xbf16>
      %c0_23 = arith.constant 0 : index
      %c0_24 = arith.constant 0 : index
      %29 = vector.load %arg6[%c0_23, %c0_24] : memref<128x32xbf16, #tpu.memory_space<vmem>>, vector<128x32xbf16>
      %cst_25 = arith.constant dense<0.000000e+00> : vector<16x32xf32>
      %30 = tpu.matmul %28, %29, %cst_25 {dimension_numbers = #tpu.dot_dimension_numbers<[1], [0], [0], [1], [0, 0, 1, 1], [], []>} : vector<16x128xbf16>, vector<128x32xbf16>, vector<16x32xf32> -> vector<16x32xf32>
      %c0_26 = arith.constant 0 : index
      %c0_27 = arith.constant 0 : index
      %31 = vector.load %arg7[%c0_26, %c0_27] : memref<1x32xf32, #tpu.memory_space<vmem>>, vector<1x32xf32>
      %32 = vector.broadcast %31 : vector<1x32xf32> to vector<16x32xf32>
      %33 = arith.addf %30, %32 : vector<16x32xf32>
      %34 = arith.truncf %33 : vector<16x32xf32> to vector<16x32xbf16>
      %c0_28 = arith.constant 0 : index
      %c0_29 = arith.constant 0 : index
      %35 = vector.load %arg13[%c0_28, %c0_29] : memref<16x32xbf16, #tpu.memory_space<vmem>>, vector<16x32xbf16>
      tpu.vector_store %arg13[%c0_28, %c0_29], %34 {strides = array<i32>} : memref<16x32xbf16, #tpu.memory_space<vmem>>, vector<16x32xbf16>,
    } else {
    }
    %c0 = arith.constant 0 : index
    %c0_1 = arith.constant 0 : index
    %3 = vector.load %arg13[%c0, %c0_1] : memref<16x32xbf16, #tpu.memory_space<vmem>>, vector<16x32xbf16>
    %c0_2 = arith.constant 0 : index
    %c0_3 = arith.constant 0 : index
    %4 = vector.load %arg8[%c0_2, %c0_3] : memref<32x128xbf16, #tpu.memory_space<vmem>>, vector<32x128xbf16>
    %cst = arith.constant dense<0.000000e+00> : vector<16x128xf32>
    %5 = tpu.matmul %3, %4, %cst {dimension_numbers = #tpu.dot_dimension_numbers<[1], [0], [0], [1], [0, 0, 1, 1], [], []>} : vector<16x32xbf16>, vector<32x128xbf16>, vector<16x128xf32> -> vector<16x128xf32>
    %6 = arith.truncf %5 : vector<16x128xf32> to vector<16x128xbf16>
    %c0_4 = arith.constant 0 : index
    %c0_5 = arith.constant 0 : index
    %7 = vector.load %arg9[%c0_4, %c0_5] : memref<16x128xbf16, #tpu.memory_space<vmem>>, vector<16x128xbf16>
    tpu.vector_store %arg9[%c0_4, %c0_5], %6 {strides = array<i32>} : memref<16x128xbf16, #tpu.memory_space<vmem>>, vector<16x128xbf16>,
    return
  }
  func.func @transform_0(%arg0: i32, %arg1: i32) -> (i32, i32) {
    %c0_i32 = arith.constant 0 : i32
    %c0_i32_0 = arith.constant 0 : i32
    return %arg0, %c0_i32 : i32, i32
  }
  func.func @transform_1(%arg0: i32, %arg1: i32) -> (i32, i32) {
    %c0_i32 = arith.constant 0 : i32
    %c0_i32_0 = arith.constant 0 : i32
    return %arg0, %c0_i32 : i32, i32
  }
  func.func @transform_2(%arg0: i32, %arg1: i32) -> (i32, i32) {
    %c0_i32 = arith.constant 0 : i32
    %c0_i32_0 = arith.constant 0 : i32
    %c0_i32_1 = arith.constant 0 : i32
    return %c0_i32, %c0_i32_0 : i32, i32
  }
  func.func @transform_3(%arg0: i32, %arg1: i32) -> (i32, i32) {
    %c0_i32 = arith.constant 0 : i32
    %c0_i32_0 = arith.constant 0 : i32
    %c0_i32_1 = arith.constant 0 : i32
    return %c0_i32, %c0_i32_0 : i32, i32
  }
  func.func @transform_4(%arg0: i32, %arg1: i32) -> (i32, i32) {
    %c0_i32 = arith.constant 0 : i32
    %c0_i32_0 = arith.constant 0 : i32
    %c0_i32_1 = arith.constant 0 : i32
    return %c0_i32, %c0_i32_0 : i32, i32
  }
  func.func @transform_5(%arg0: i32, %arg1: i32) -> (i32, i32) {
    %c0_i32 = arith.constant 0 : i32
    %c0_i32_0 = arith.constant 0 : i32
    %c0_i32_1 = arith.constant 0 : i32
    return %c0_i32, %c0_i32_0 : i32, i32
  }
  func.func @transform_6(%arg0: i32, %arg1: i32) -> (i32, i32) {
    %c0_i32 = arith.constant 0 : i32
    %c0_i32_0 = arith.constant 0 : i32
    return %c0_i32, %arg1 : i32, i32
  }
  func.func @transform_7(%arg0: i32, %arg1: i32) -> (i32, i32) {
    %c0_i32 = arith.constant 0 : i32
    return %arg0, %arg1 : i32, i32
  }
  func.func @transform_8(%arg0: i32, %arg1: i32) -> (i32, i32) {
    %c0_i32 = arith.constant 0 : i32
    %c0_i32_0 = arith.constant 0 : i32
    return %arg0, %c0_i32 : i32, i32
  }
  func.func @transform_9(%arg0: i32, %arg1: i32) -> (i32, i32) {
    %c0_i32 = arith.constant 0 : i32
    %c0_i32_0 = arith.constant 0 : i32
    return %arg0, %c0_i32 : i32, i32
  }
  func.func @transform_10(%arg0: i32, %arg1: i32) -> (i32, i32) {
    %c0_i32 = arith.constant 0 : i32
    %c0_i32_0 = arith.constant 0 : i32
    return %arg0, %c0_i32 : i32, i32
  }
}

</mosaic_0001>

<llo_original>
// kernel: tpu_custom_call.1
$region0: #{tpu_custom_call.1}
  #allocation0 [shape = 'u32[]', space=smem, size = 0x4, offset = 0x4, fixed_abs, tag = 'smem constant byte address 0x4 - core index']
  #allocation1 [shape = 'u32[144,128]{1,0:T(1,128)}', space=vmem, size = 0x12000, scoped, tag = 'internal scratch']
  #allocation2 [shape = 'bf16[16,32]{1,0:T(8,128)(2,1)}', space=vmem, size = 0x1000, scoped, tag = 'scratch operand']
  %s0 = inlined_call_operand.vmem [shape: f32[16,32], index: 0, kind: input, shape index: {}]
  %s1 = inlined_call_operand.vmem [shape: f32[16,128], index: 1, kind: input, shape index: {}]
  %s2 = inlined_call_operand.vmem [shape: bf16[32,256], index: 2, kind: input, shape index: {}]
  %s3 = inlined_call_operand.vmem [shape: f32[1,256], index: 3, kind: input, shape index: {}]
  %s4 = inlined_call_operand.vmem [shape: bf16[128,32], index: 4, kind: input, shape index: {}]
  %s5 = inlined_call_operand.vmem [shape: f32[1,32], index: 5, kind: input, shape index: {}]
  %s6 = inlined_call_operand.vmem [shape: bf16[32,128], index: 6, kind: input, shape index: {}]
  %s7 = inlined_call_operand.hbm [shape: bf16[16,128], index: 7, kind: output, shape index: {0}]
  %s8 = inlined_call_operand.hbm [shape: f32[16,128], index: 8, kind: output, shape index: {1}]
  %s9 = inlined_call_operand.hbm [shape: f32[16,128], index: 9, kind: output, shape index: {2}]
  %s10 = inlined_call_operand.hbm [shape: f32[16,128], index: 10, kind: output, shape index: {3}]
  %11 = xla_tuple %s7, %s8, %s9, %s10
  %s12 = sld [smem:[#allocation0]]
  $region66: #{tpu_custom_call.1} parent=0
    _
  %s14 = ssub.s32 1, %s12
  %s15 = scalar_select 0, %s14, %s12
  $region1: #{tpu_custom_call.1} parent=0
    #allocation3 [shape = 'u8[4096]{0}', space=vmem, size = 0x1000, scoped, tag = 'output window, operand 0, single buffered']
    #allocation4 [shape = 's32[1]{0}', space=sflag, size = 0x4, scoped, tag = 'scoped memory for tpu_custom_call.1']
    #allocation5 [shape = 'u8[8192]{0}', space=vmem, size = 0x2000, scoped, tag = 'output window, operand 1, single buffered']
    #allocation6 [shape = 's32[1]{0}', space=sflag, size = 0x4, scoped, tag = 'scoped memory for tpu_custom_call.1']
    #allocation7 [shape = 'u8[8192]{0}', space=vmem, size = 0x2000, scoped, tag = 'output window, operand 2, single buffered']
    #allocation8 [shape = 'u8[8192]{0}', space=vmem, size = 0x2000, scoped, tag = 'output window, operand 3, single buffered']
    #allocation9 [shape = 's32[1]{0}', space=sflag, size = 0x4, scoped, tag = 'scoped memory for tpu_custom_call.1']
    %16 = vsyncpa [#allocation4], 0
    %17 = vsyncpa [#allocation6], 0
    %18 = vsyncpa [#allocation9], 0
    // Predicated region
    $region2: #{tpu_custom_call.1} parent=1 // pred_check
      _
    $region3: #{tpu_custom_call.1} parent=1 // pred_check_branch
      %20 = sbr.rel (0) target = $region5
    $region4: #{tpu_custom_call.1} parent=1 // pred_region
      _
    $region5: #{tpu_custom_call.1} parent=1 // pred_fallthru
      _
    // Predicated region
    $region6: #{tpu_custom_call.1} parent=1 // pred_check
      _
    $region7: #{tpu_custom_call.1} parent=1 // pred_check_branch
      %22 = sbr.rel (0) target = $region9
    $region8: #{tpu_custom_call.1} parent=1 // pred_region
      _
    $region9: #{tpu_custom_call.1} parent=1 // pred_fallthru
      _
    // Predicated region
    $region10: #{tpu_custom_call.1} parent=1 // pred_check
      _
    $region11: #{tpu_custom_call.1} parent=1 // pred_check_branch
      %24 = sbr.rel (0) target = $region13
    $region12: #{tpu_custom_call.1} parent=1 // pred_region
      _
    $region13: #{tpu_custom_call.1} parent=1 // pred_fallthru
      _
    // Predicated region
    $region14: #{tpu_custom_call.1} parent=1 // pred_check
      _
    $region15: #{tpu_custom_call.1} parent=1 // pred_check_branch
      %26 = sbr.rel (0) target = $region17
    $region16: #{tpu_custom_call.1} parent=1 // pred_region
      _
    $region17: #{tpu_custom_call.1} parent=1 // pred_fallthru
      _
    // Predicated region
    $region18: #{tpu_custom_call.1} parent=1 // pred_check
      _
    $region19: #{tpu_custom_call.1} parent=1 // pred_check_branch
      %28 = sbr.rel (0) target = $region21
    $region20: #{tpu_custom_call.1} parent=1 // pred_region
      _
    $region21: #{tpu_custom_call.1} parent=1 // pred_fallthru
      _
    // Predicated region
    $region22: #{tpu_custom_call.1} parent=1 // pred_check
      _
    $region23: #{tpu_custom_call.1} parent=1 // pred_check_branch
      %30 = sbr.rel (0) target = $region25
    $region24: #{tpu_custom_call.1} parent=1 // pred_region
      _
    $region25: #{tpu_custom_call.1} parent=1 // pred_fallthru
      _
    // Predicated region
    $region26: #{tpu_custom_call.1} parent=1 // pred_check
      _
    $region27: #{tpu_custom_call.1} parent=1 // pred_check_branch
      %32 = sbr.rel (0) target = $region29
    $region28: #{tpu_custom_call.1} parent=1 // pred_region
      _
    $region29: #{tpu_custom_call.1} parent=1 // pred_fallthru
      _
    %p34 = scmp.eq.s32.totalorder 0, 0
    // Predicated region
    $region30: #{tpu_custom_call.1} parent=1 // pred_check
      %p35 = pneg %p34
    $region31: #{tpu_custom_call.1} parent=1 // pred_check_branch
      %37 = sbr.rel (%p35) target = $region33
    $region32: #{tpu_custom_call.1} parent=1 // pred_region
      %v38 = vld [vmem:[%s0] sm:$0xff]
      %v39 = vld [vmem:[%s0 + $0x8] sm:$0xff]
      %v40 = vpack.c.bf16 %v39, %v38
      %v41 = vld [vmem:[%s2] sm:$0xff]
      %v42 = vld [vmem:[%s2 + $0x8] sm:$0xff]
      %v43 = vld [vmem:[%s2 + $0x10] sm:$0xff]
      %v44 = vld [vmem:[%s2 + $0x18] sm:$0xff]
      %v45 = vld [vmem:[%s3] sm:$0x3]
      %v47 = vlaneseq
      %v48 = vshrl.u32 %v47, 7
      %v49 = vsub.s32 0, %v48
      %v50 = vrot.slane %v45, %v49
      %v51 = vlaneseq
      %v52 = vshrl.u32 %v51, 7
      %v53 = vsub.s32 1, %v52
      %v54 = vrot.slane %v45, %v53
      %v61 = vunpack.c.l.b16 %v41
      %v62 = vunpack.c.h.b16 %v41
      %v63 = vunpack.c.l.b16 %v42
      %v64 = vunpack.c.h.b16 %v42
      %v65 = vunpack.c.l.b16 %v43
      %v66 = vunpack.c.h.b16 %v43
      %v67 = vunpack.c.l.b16 %v44
      %v68 = vunpack.c.h.b16 %v44
      %v69 = vpack.c.b16 %v63, %v61
      %v70 = vpack.c.b16 %v64, %v62
      %v71 = vpack.c.b16 %v67, %v65
      %v72 = vpack.c.b16 %v68, %v66
      %vm77 = vcmask 261120
      %v79 = vsel %vm77, %v40, 0
      %81 = vmatprep.subr.bf16.mxu0 0
      %82 = vmatpush1.bf16.msra.mxu0 0
      %83 = vmatprep.subr.bf16.mxu0 0
      %84 = vmatpush1.bf16.msra.mxu0 0
      %85 = vmatprep.subr.bf16.mxu0 0
      %86 = vmatpush1.bf16.msra.mxu0 0
      %87 = vmatprep.subr.bf16.mxu0 0
      %88 = vmatpush1.bf16.msra.mxu0 0
      %89 = vmatprep.subr.bf16.mxu0 0
      %90 = vmatpush1.bf16.msra.mxu0 0
      %91 = vmatprep.subr.bf16.mxu0 0
      %92 = vmatpush1.bf16.msra.mxu0 0
      %93 = vmatprep.subr.bf16.mxu0 %v72
      %94 = vmatpush1.bf16.msra.mxu0 %v71
      %95 = vmatprep.subr.bf16.mxu0 %v70
      %96 = vmatpush1.bf16.msra.mxu0 %v69
      %97 = vmatprep.subr.bf16.mxu0 0
      %98 = vmatpush2.bf16.msra.mxu0 0
      %99 = vmatprep.subr.bf16.mxu0 0
      %100 = vmatpush2.bf16.msra.mxu0 0
      %101 = vmatprep.subr.bf16.mxu0 0
      %102 = vmatpush2.bf16.msra.mxu0 0
      %103 = vmatprep.subr.bf16.mxu0 0
      %104 = vmatpush2.bf16.msra.mxu0 0
      %105 = vmatprep.subr.bf16.mxu0 0
      %106 = vmatpush2.bf16.msra.mxu0 0
      %107 = vmatprep.subr.bf16.mxu0 0
      %108 = vmatpush2.bf16.msra.mxu0 0
      %109 = vmatprep.subr.bf16.mxu0 0
      %110 = vmatpush2.bf16.msra.mxu0 0
      %111 = vmatprep.subr.bf16.mxu0 0
      %112 = vmatpush2.bf16.msra.mxu0 0
      %113 = vmatprep.mubr.bf16.mxu0 0
      %114 = vmatmul.mubr.bf16.gmra.mxu0 %v79
      %v115 = vpop.f32.mrf.mxu0
      %v116 = vadd.f32 %v50, %v115
      %v117 = vpop.f32.mrf.mxu0
      %v118 = vadd.f32 %v54, %v117
      %v119 = vpop.f32.mrf.mxu0
      %v120 = vadd.f32 %v50, %v119
      %v121 = vpop.f32.mrf.mxu0
      %v122 = vadd.f32 %v54, %v121
      %123 = vdwg.mxu0
      %124 = vst [vmem:[#allocation5] sm:$0xff] %v116
      %125 = vst [vmem:[#allocation5 + $0x8] sm:$0xff] %v120
      %v126 = vmax.f32 %v118, -2.0
      %v127 = vmax.f32 %v122, -2.0
      %v128 = vmin.f32 %v126, 10.0
      %v129 = vmin.f32 %v127, 10.0
      %130 = vst [vmem:[#allocation7] sm:$0xff] %v128
      %131 = vst [vmem:[#allocation7 + $0x8] sm:$0xff] %v129
      %v132 = vmul.f32 %v128, 1.442695
      %v133 = vpow.pop %v132
      %v134 = vmul.f32 %v129, 1.442695
      %v135 = vpow.pop %v134
      %136 = vst [vmem:[#allocation8] sm:$0xff] %v133
      %137 = vst [vmem:[#allocation8 + $0x8] sm:$0xff] %v135
      %v138 = vld [vmem:[%s1] sm:$0xff]
      %v139 = vld [vmem:[%s1 + $0x8] sm:$0xff]
      %v140 = vmul.f32 %v138, %v133
      %v141 = vmul.f32 %v139, %v135
      %v142 = vadd.f32 %v116, %v140
      %v143 = vadd.f32 %v120, %v141
      %v144 = vpack.c.bf16 %v143, %v142
      %v145 = vld [vmem:[%s4] sm:$0xf]
      %v146 = vld [vmem:[%s4 + $0x4] sm:$0xf]
      %v147 = vld [vmem:[%s4 + $0x8] sm:$0xf]
      %v148 = vld [vmem:[%s4 + $0xc] sm:$0xf]
      %v149 = vld [vmem:[%s4 + $0x10] sm:$0xf]
      %v150 = vld [vmem:[%s4 + $0x14] sm:$0xf]
      %v151 = vld [vmem:[%s4 + $0x18] sm:$0xf]
      %v152 = vld [vmem:[%s4 + $0x1c] sm:$0xf]
      %v153 = vld [vmem:[%s4 + $0x20] sm:$0xf]
      %v154 = vld [vmem:[%s4 + $0x24] sm:$0xf]
      %v155 = vld [vmem:[%s4 + $0x28] sm:$0xf]
      %v156 = vld [vmem:[%s4 + $0x2c] sm:$0xf]
      %v157 = vld [vmem:[%s4 + $0x30] sm:$0xf]
      %v158 = vld [vmem:[%s4 + $0x34] sm:$0xf]
      %v159 = vld [vmem:[%s4 + $0x38] sm:$0xf]
      %v160 = vld [vmem:[%s4 + $0x3c] sm:$0xf]
      %v161 = vld [vmem:[%s5] sm:$0x1]
      %v163 = vlaneseq
      %v164 = vshrl.u32 %v163, 7
      %v165 = vsub.s32 0, %v164
      %v166 = vrot.slane %v161, %v165
      %v184 = vunpack.c.l.b16 %v145
      %v185 = vunpack.c.l.b16 %v146
      %v186 = vunpack.c.l.b16 %v147
      %v187 = vunpack.c.l.b16 %v148
      %v188 = vunpack.c.l.b16 %v149
      %v189 = vunpack.c.l.b16 %v150
      %v190 = vunpack.c.l.b16 %v151
      %v191 = vunpack.c.l.b16 %v152
      %v192 = vunpack.c.l.b16 %v153
      %v193 = vunpack.c.l.b16 %v154
      %v194 = vunpack.c.l.b16 %v155
      %v195 = vunpack.c.l.b16 %v156
      %v196 = vunpack.c.l.b16 %v157
      %v197 = vunpack.c.l.b16 %v158
      %v198 = vunpack.c.l.b16 %v159
      %v199 = vunpack.c.l.b16 %v160
      %v200 = vpack.c.b16 %v185, %v184
      %v201 = vpack.c.b16 %v187, %v186
      %v202 = vpack.c.b16 %v189, %v188
      %v203 = vpack.c.b16 %v191, %v190
      %v204 = vpack.c.b16 %v193, %v192
      %v205 = vpack.c.b16 %v195, %v194
      %v206 = vpack.c.b16 %v197, %v196
      %v207 = vpack.c.b16 %v199, %v198
      %216 = vmatprep.subr.bf16.mxu0 0
      %217 = vmatpush1.bf16.msra.mxu0 %v207
      %218 = vmatprep.subr.bf16.mxu0 0
      %219 = vmatpush1.bf16.msra.mxu0 %v206
      %220 = vmatprep.subr.bf16.mxu0 0
      %221 = vmatpush1.bf16.msra.mxu0 %v205
      %222 = vmatprep.subr.bf16.mxu0 0
      %223 = vmatpush1.bf16.msra.mxu0 %v204
      %224 = vmatprep.subr.bf16.mxu0 0
      %225 = vmatpush1.bf16.msra.mxu0 %v203
      %226 = vmatprep.subr.bf16.mxu0 0
      %227 = vmatpush1.bf16.msra.mxu0 %v202
      %228 = vmatprep.subr.bf16.mxu0 0
      %229 = vmatpush1.bf16.msra.mxu0 %v201
      %230 = vmatprep.subr.bf16.mxu0 0
      %231 = vmatpush1.bf16.msra.mxu0 %v200
      %232 = vmatprep.subr.bf16.mxu0 0
      %233 = vmatpush2.bf16.msra.mxu0 0
      %234 = vmatprep.subr.bf16.mxu0 0
      %235 = vmatpush2.bf16.msra.mxu0 0
      %236 = vmatprep.subr.bf16.mxu0 0
      %237 = vmatpush2.bf16.msra.mxu0 0
      %238 = vmatprep.subr.bf16.mxu0 0
      %239 = vmatpush2.bf16.msra.mxu0 0
      %240 = vmatprep.subr.bf16.mxu0 0
      %241 = vmatpush2.bf16.msra.mxu0 0
      %242 = vmatprep.subr.bf16.mxu0 0
      %243 = vmatpush2.bf16.msra.mxu0 0
      %244 = vmatprep.subr.bf16.mxu0 0
      %245 = vmatpush2.bf16.msra.mxu0 0
      %246 = vmatprep.subr.bf16.mxu0 0
      %247 = vmatpush2.bf16.msra.mxu0 0
      %248 = vmatprep.mubr.bf16.mxu0 0
      %249 = vmatmul.mubr.bf16.gmra.mxu0 %v144
      %v250 = vpop.f32.mrf.mxu0
      %v251 = vadd.f32 %v166, %v250
      %v252 = vpop.f32.mrf.mxu0
      %v253 = vpop.f32.mrf.mxu0
      %v254 = vadd.f32 %v166, %v253
      %v255 = vpop.f32.mrf.mxu0
      %256 = vdwg.mxu0
      %v257 = vpack.c.bf16 %v254, %v251
      %v259 = vunpack.c.l.b16 %v257
      %v260 = vunpack.c.h.b16 %v257
      %v261 = vpack.c.b16 %v259, %v259
      %v262 = vpack.c.b16 %v260, %v260
      %vm265 = vcmask 257024
      %266 = vst.msk [vmem:[#allocation2] sm:$0xf] %vm265, %v261
      %267 = vst.msk [vmem:[#allocation2 + $0x4] sm:$0xf] %vm265, %v262
    $region33: #{tpu_custom_call.1} parent=1 // pred_fallthru
      _
    %v268 = vld [vmem:[#allocation2] sm:$0xf]
    %v269 = vld [vmem:[#allocation2 + $0x4] sm:$0xf]
    %v270 = vld [vmem:[%s6] sm:$0xf]
    %v271 = vld [vmem:[%s6 + $0x4] sm:$0xf]
    %v272 = vld [vmem:[%s6 + $0x8] sm:$0xf]
    %v273 = vld [vmem:[%s6 + $0xc] sm:$0xf]
    %v276 = vunpack.c.l.b16 %v268
    %v277 = vunpack.c.l.b16 %v269
    %v278 = vpack.c.b16 %v277, %v276
    %v283 = vunpack.c.l.b16 %v270
    %v284 = vunpack.c.l.b16 %v271
    %v285 = vunpack.c.l.b16 %v272
    %v286 = vunpack.c.l.b16 %v273
    %v287 = vpack.c.b16 %v284, %v283
    %v288 = vpack.c.b16 %v286, %v285
    %vm291 = vcmask 261120
    %v293 = vsel %vm291, %v278, 0
    %295 = vmatprep.subr.bf16.mxu0 0
    %296 = vmatpush1.bf16.msra.mxu0 0
    %297 = vmatprep.subr.bf16.mxu0 0
    %298 = vmatpush1.bf16.msra.mxu0 0
    %299 = vmatprep.subr.bf16.mxu0 0
    %300 = vmatpush1.bf16.msra.mxu0 0
    %301 = vmatprep.subr.bf16.mxu0 0
    %302 = vmatpush1.bf16.msra.mxu0 0
    %303 = vmatprep.subr.bf16.mxu0 0
    %304 = vmatpush1.bf16.msra.mxu0 0
    %305 = vmatprep.subr.bf16.mxu0 0
    %306 = vmatpush1.bf16.msra.mxu0 0
    %307 = vmatprep.subr.bf16.mxu0 0
    %308 = vmatpush1.bf16.msra.mxu0 %v288
    %309 = vmatprep.subr.bf16.mxu0 0
    %310 = vmatpush1.bf16.msra.mxu0 %v287
    %311 = vmatprep.subr.bf16.mxu0 0
    %312 = vmatpush2.bf16.msra.mxu0 0
    %313 = vmatprep.subr.bf16.mxu0 0
    %314 = vmatpush2.bf16.msra.mxu0 0
    %315 = vmatprep.subr.bf16.mxu0 0
    %316 = vmatpush2.bf16.msra.mxu0 0
    %317 = vmatprep.subr.bf16.mxu0 0
    %318 = vmatpush2.bf16.msra.mxu0 0
    %319 = vmatprep.subr.bf16.mxu0 0
    %320 = vmatpush2.bf16.msra.mxu0 0
    %321 = vmatprep.subr.bf16.mxu0 0
    %322 = vmatpush2.bf16.msra.mxu0 0
    %323 = vmatprep.subr.bf16.mxu0 0
    %324 = vmatpush2.bf16.msra.mxu0 0
    %325 = vmatprep.subr.bf16.mxu0 0
    %326 = vmatpush2.bf16.msra.mxu0 0
    %327 = vmatprep.mubr.bf16.mxu0 0
    %328 = vmatmul.mubr.bf16.gmra.mxu0 %v293
    %v329 = vpop.f32.mrf.mxu0
    %v330 = vadd.f32 0.0, %v329
    %v331 = vpop.f32.mrf.mxu0
    %v332 = vpop.f32.mrf.mxu0
    %v333 = vadd.f32 0.0, %v332
    %v334 = vpop.f32.mrf.mxu0
    %335 = vdwg.mxu0
    %v336 = vpack.c.bf16 %v333, %v330
    %v338 = vunpack.c.l.b16 %v336
    %v339 = vunpack.c.h.b16 %v336
    %v340 = vpack.c.b16 %v338, %v338
    %v341 = vpack.c.b16 %v339, %v339
    %344 = vst [vmem:[#allocation3] sm:$0xf] %v340
    %345 = vst [vmem:[#allocation3 + $0x4] sm:$0xf] %v341
    // Predicated region
    $region34: #{tpu_custom_call.1} parent=1 // pred_check
      _
    $region35: #{tpu_custom_call.1} parent=1 // pred_check_branch
      %347 = sbr.rel (0) target = $region37
    $region36: #{tpu_custom_call.1} parent=1 // pred_region
      %s349 = ssub.s32 128, 128
      %350 = vsyncadd [#allocation4], %s349
      %s351 = sshll.u32 [#allocation3], 4
      %s352 = int_to_ptr.vmem [resolvable:$true] %s351
      %357 = dma.vmem_to_hbm [thread:$0]  %s352, 128, %s7, [#allocation4], 64, 64, 4
    $region37: #{tpu_custom_call.1} parent=1 // pred_fallthru
      _
    // Predicated region
    $region38: #{tpu_custom_call.1} parent=1 // pred_check
      _
    $region39: #{tpu_custom_call.1} parent=1 // pred_check_branch
      %359 = sbr.rel (0) target = $region41
    $region40: #{tpu_custom_call.1} parent=1 // pred_region
      %s361 = ssub.s32 256, 256
      %362 = vsyncadd [#allocation6], %s361
      %s363 = sshll.u32 [#allocation5], 4
      %s364 = int_to_ptr.vmem [resolvable:$true] %s363
      %369 = dma.vmem_to_hbm [thread:$0]  %s364, 256, %s8, [#allocation6], 128, 128, 8
    $region41: #{tpu_custom_call.1} parent=1 // pred_fallthru
      _
    // Predicated region
    $region42: #{tpu_custom_call.1} parent=1 // pred_check
      _
    $region43: #{tpu_custom_call.1} parent=1 // pred_check_branch
      %371 = sbr.rel (0) target = $region45
    $region44: #{tpu_custom_call.1} parent=1 // pred_region
      %s373 = ssub.s32 256, 256
      %374 = vsyncadd [#allocation6], %s373
      %s375 = sshll.u32 [#allocation7], 4
      %s376 = int_to_ptr.vmem [resolvable:$true] %s375
      %381 = dma.vmem_to_hbm [thread:$0]  %s376, 256, %s9, [#allocation6], 128, 128, 8
    $region45: #{tpu_custom_call.1} parent=1 // pred_fallthru
      _
    // Predicated region
    $region46: #{tpu_custom_call.1} parent=1 // pred_check
      _
    $region47: #{tpu_custom_call.1} parent=1 // pred_check_branch
      %383 = sbr.rel (0) target = $region49
    $region48: #{tpu_custom_call.1} parent=1 // pred_region
      %s385 = ssub.s32 256, 256
      %386 = vsyncadd [#allocation9], %s385
      %s387 = sshll.u32 [#allocation8], 4
      %s388 = int_to_ptr.vmem [resolvable:$true] %s387
      %393 = dma.vmem_to_hbm [thread:$0]  %s388, 256, %s10, [#allocation9], 128, 128, 8
    $region49: #{tpu_custom_call.1} parent=1 // pred_fallthru
      _
    // Predicated region
    $region50: #{tpu_custom_call.1} parent=1 // pred_check
      _
    $region51: #{tpu_custom_call.1} parent=1 // pred_check_branch
      %395 = sbr.rel (0) target = $region53
    $region52: #{tpu_custom_call.1} parent=1 // pred_region
      %396 = dma.done [#allocation4], 128
    $region53: #{tpu_custom_call.1} parent=1 // pred_fallthru
      _
    // Predicated region
    $region54: #{tpu_custom_call.1} parent=1 // pred_check
      _
    $region55: #{tpu_custom_call.1} parent=1 // pred_check_branch
      %398 = sbr.rel (0) target = $region57
    $region56: #{tpu_custom_call.1} parent=1 // pred_region
      %399 = dma.done [#allocation6], 256
    $region57: #{tpu_custom_call.1} parent=1 // pred_fallthru
      _
    // Predicated region
    $region58: #{tpu_custom_call.1} parent=1 // pred_check
      _
    $region59: #{tpu_custom_call.1} parent=1 // pred_check_branch
      %401 = sbr.rel (0) target = $region61
    $region60: #{tpu_custom_call.1} parent=1 // pred_region
      %402 = dma.done [#allocation6], 256
    $region61: #{tpu_custom_call.1} parent=1 // pred_fallthru
      _
    // Predicated region
    $region62: #{tpu_custom_call.1} parent=1 // pred_check
      _
    $region63: #{tpu_custom_call.1} parent=1 // pred_check_branch
      %404 = sbr.rel (0) target = $region65
    $region64: #{tpu_custom_call.1} parent=1 // pred_region
      %405 = dma.done [#allocation9], 256
    $region65: #{tpu_custom_call.1} parent=1 // pred_fallthru
      _
    %406 = vsyncpa [#allocation4], 1
    %407 = vsyncpa [#allocation6], 1
    %408 = vsyncpa [#allocation9], 1

</llo_original>
